<compile_context>
chip_gen: v6e
topology: v6e:2x2x1
jax: 0.10.0
libtpu: 0.0.40
codegen_flags: <defaults>
</compile_context>

<pallas_src>
import jax
import jax.numpy as jnp
from jax.experimental import pallas as pl
from jax.experimental.pallas import tpu as pltpu

_LANE = 128


def gin_conv_kernel(eps_ref, x_ref, a_ref, w1_ref, b1_ref,
                    gamma_ref, beta_ref, w2_ref, b2_ref, out_ref):
    B, N, d_in = x_ref.shape
    d_out = out_ref.shape[-1]
    eps = eps_ref[0]

    # --- GIN aggregation: (1 + eps) * X + A @ X as one batched MXU contraction ---
    agg = jax.lax.dot_general(
        a_ref[...], x_ref[...],
        dimension_numbers=(((2,), (1,)), ((0,), (0,))),
        preferred_element_type=jnp.float32)                    # [B, N, d_in]
    h = ((1.0 + eps) * x_ref[...] + agg).reshape(B * N, d_in)  # [B*N, d_in]

    # --- MLP layer 1: Linear -> BatchNorm1d (train-mode stats) -> ReLU ---
    z1 = jnp.dot(h, w1_ref[...], preferred_element_type=jnp.float32) + b1_ref[...]

    # Fused one-pass batch statistics (biased variance), eps = 1e-5.
    inv_n = jnp.float32(1.0 / (B * N))
    s = jnp.sum(z1, axis=0, keepdims=True)
    ss = jnp.sum(z1 * z1, axis=0, keepdims=True)
    mean = s * inv_n
    var = ss * inv_n - mean * mean
    z1 = (z1 - mean) * jax.lax.rsqrt(var + 1e-5)
    z1 = jnp.maximum(z1 * gamma_ref[...] + beta_ref[...], 0.0)

    # --- MLP layer 2: Linear, then one lane-dense full-tile store ---
    z2 = jnp.dot(z1, w2_ref[...], preferred_element_type=jnp.float32) + b2_ref[...]
    out_ref[...] = z2.reshape(B, N, d_out)


def _pad_last(x, target):
    pad = target - x.shape[-1]
    if pad == 0:
        return x
    return jnp.pad(x, [(0, 0)] * (x.ndim - 1) + [(0, pad)])


def gin_conv(eps, X, A, W1, b1, gamma, beta, W2, b2):
    B, N, d_in = X.shape
    hidden = W1.shape[1]
    d_out = W2.shape[1]

    # Pad feature (lane) dims to a multiple of 128 so vreg loads/stores are
    # unmasked. Zero-padding is exact: padded W rows/cols, biases, gamma/beta
    # are zero, so padded channels stay identically zero through the MLP.
    d_in_p = max(_LANE, pl.cdiv(d_in, _LANE) * _LANE)
    hid_p = max(_LANE, pl.cdiv(hidden, _LANE) * _LANE)
    d_out_p = max(_LANE, pl.cdiv(d_out, _LANE) * _LANE)

    Xp = _pad_last(X, d_in_p)
    W1p = jnp.pad(W1, ((0, d_in_p - d_in), (0, hid_p - hidden)))
    b1p = _pad_last(b1, hid_p)
    gammap = _pad_last(gamma, hid_p)
    betap = _pad_last(beta, hid_p)
    W2p = jnp.pad(W2, ((0, hid_p - hidden), (0, d_out_p - d_out)))
    b2p = _pad_last(b2, d_out_p)

    vmem = pl.BlockSpec(memory_space=pltpu.MemorySpace.VMEM)
    smem = pl.BlockSpec(memory_space=pltpu.MemorySpace.SMEM)

    out_padded = pl.pallas_call(
        gin_conv_kernel,
        out_shape=jax.ShapeDtypeStruct((B, N, d_out_p), jnp.float32),
        in_specs=[smem, vmem, vmem, vmem, vmem, vmem, vmem, vmem, vmem],
        out_specs=vmem,
    )(eps, Xp, A, W1p, b1p, gammap, betap, W2p, b2p)

    return out_padded[:, :, :d_out]


def gin_conv_reference(eps, X, A, W1, b1, gamma, beta, W2, b2):
    """Pure-JAX reference mirroring the PyTorch forward."""
    B, N, d_in = X.shape
    agg = jnp.einsum('bij,bjd->bid', A, X)
    h = (1.0 + eps[0]) * X + agg
    h2 = h.reshape(B * N, d_in)
    z1 = h2 @ W1 + b1
    mean = z1.mean(axis=0, keepdims=True)
    var = ((z1 - mean) ** 2).mean(axis=0, keepdims=True)
    z1 = (z1 - mean) / jnp.sqrt(var + 1e-5) * gamma + beta
    z1 = jnp.maximum(z1, 0.0)
    z2 = z1 @ W2 + b2
    return z2.reshape(B, N, -1)


if __name__ == "__main__":
    # Small deterministic problem: B=2 graphs, N=16 nodes,
    # in_channels=8, hidden=out_channels=32 (MLP: 8 -> 32 -> 32).
    B, N, d_in, hidden, d_out = 2, 16, 8, 32, 32

    key = jax.random.PRNGKey(0)
    kx, ka, kw1, kb1, kw2, kb2 = jax.random.split(key, 6)

    X = jax.random.normal(kx, (B, N, d_in), dtype=jnp.float32)
    # random binary adjacency (float, as in torch.matmul(A, X))
    A = (jax.random.uniform(ka, (B, N, N)) > 0.5).astype(jnp.float32)

    # Deterministic parameter init (PyTorch-style uniform bounds for Linear,
    # BatchNorm1d gamma=1 / beta=0, learnable GIN eps).
    lim1 = 1.0 / jnp.sqrt(jnp.float32(d_in))
    lim2 = 1.0 / jnp.sqrt(jnp.float32(hidden))
    W1 = jax.random.uniform(kw1, (d_in, hidden), minval=-lim1, maxval=lim1, dtype=jnp.float32)
    b1 = jax.random.uniform(kb1, (1, hidden), minval=-lim1, maxval=lim1, dtype=jnp.float32)
    W2 = jax.random.uniform(kw2, (hidden, d_out), minval=-lim2, maxval=lim2, dtype=jnp.float32)
    b2 = jax.random.uniform(kb2, (1, d_out), minval=-lim2, maxval=lim2, dtype=jnp.float32)
    gamma = jnp.ones((1, hidden), dtype=jnp.float32)
    beta = jnp.zeros((1, hidden), dtype=jnp.float32)
    eps = jnp.array([0.1], dtype=jnp.float32)

    out = gin_conv(eps, X, A, W1, b1, gamma, beta, W2, b2)
    out = jax.block_until_ready(out)

    ref = gin_conv_reference(eps, X, A, W1, b1, gamma, beta, W2, b2)
    assert out.shape == (B, N, d_out)
    assert jnp.allclose(out, ref, atol=1e-4, rtol=1e-4)

    print("KERNEL_OK")
</pallas_src>

<mosaic_0001>
module attributes {stable_mosaic.version = 11 : i64} {
  func.func @gin_conv_kernel(%arg0: memref<1xf32, #tpu.memory_space<smem>>, %arg1: memref<2x16x128xf32, #tpu.memory_space<vmem>>, %arg2: memref<2x16x16xf32, #tpu.memory_space<vmem>>, %arg3: memref<128x128xf32, #tpu.memory_space<vmem>>, %arg4: memref<1x128xf32, #tpu.memory_space<vmem>>, %arg5: memref<1x128xf32, #tpu.memory_space<vmem>>, %arg6: memref<1x128xf32, #tpu.memory_space<vmem>>, %arg7: memref<128x128xf32, #tpu.memory_space<vmem>>, %arg8: memref<1x128xf32, #tpu.memory_space<vmem>>, %arg9: memref<2x16x128xf32, #tpu.memory_space<vmem>>) attributes {dimension_semantics = [], scalar_prefetch = 0 : i64, scratch_operands = 0 : i64, tpu.core_type = #tpu.core_type<tc>} {
    %c0 = arith.constant 0 : index
    %0 = memref.load %arg0[%c0] : memref<1xf32, #tpu.memory_space<smem>>
    %c0_0 = arith.constant 0 : index
    %c0_1 = arith.constant 0 : index
    %c0_2 = arith.constant 0 : index
    %1 = vector.load %arg2[%c0_0, %c0_1, %c0_2] : memref<2x16x16xf32, #tpu.memory_space<vmem>>, vector<2x16x16xf32>
    %c0_3 = arith.constant 0 : index
    %c0_4 = arith.constant 0 : index
    %c0_5 = arith.constant 0 : index
    %2 = vector.load %arg1[%c0_3, %c0_4, %c0_5] : memref<2x16x128xf32, #tpu.memory_space<vmem>>, vector<2x16x128xf32>
    %cst = arith.constant dense<0.000000e+00> : vector<2x16x128xf32>
    %3 = tpu.matmul %1, %2, %cst {dimension_numbers = #tpu.dot_dimension_numbers<[2], [1], [1], [2], [0, 0, 0, 1, 1, 2], [0], [0]>} : vector<2x16x16xf32>, vector<2x16x128xf32>, vector<2x16x128xf32> -> vector<2x16x128xf32>
    %cst_6 = arith.constant 1.000000e+00 : f32
    %4 = arith.addf %cst_6, %0 : f32
    %c0_7 = arith.constant 0 : index
    %c0_8 = arith.constant 0 : index
    %c0_9 = arith.constant 0 : index
    %5 = vector.load %arg1[%c0_7, %c0_8, %c0_9] : memref<2x16x128xf32, #tpu.memory_space<vmem>>, vector<2x16x128xf32>
    %6 = vector.broadcast %4 : f32 to vector<2x16x128xf32>
    %7 = arith.mulf %6, %5 : vector<2x16x128xf32>
    %8 = arith.addf %7, %3 : vector<2x16x128xf32>
    %9 = vector.shape_cast %8 : vector<2x16x128xf32> to vector<32x128xf32>
    %c0_10 = arith.constant 0 : index
    %c0_11 = arith.constant 0 : index
    %10 = vector.load %arg3[%c0_10, %c0_11] : memref<128x128xf32, #tpu.memory_space<vmem>>, vector<128x128xf32>
    %cst_12 = arith.constant dense<0.000000e+00> : vector<32x128xf32>
    %11 = tpu.matmul %9, %10, %cst_12 {dimension_numbers = #tpu.dot_dimension_numbers<[1], [0], [0], [1], [0, 0, 1, 1], [], []>} : vector<32x128xf32>, vector<128x128xf32>, vector<32x128xf32> -> vector<32x128xf32>
    %c0_13 = arith.constant 0 : index
    %c0_14 = arith.constant 0 : index
    %12 = vector.load %arg4[%c0_13, %c0_14] : memref<1x128xf32, #tpu.memory_space<vmem>>, vector<1x128xf32>
    %13 = vector.broadcast %12 : vector<1x128xf32> to vector<32x128xf32>
    %14 = arith.addf %11, %13 : vector<32x128xf32>
    %cst_15 = arith.constant dense<0.000000e+00> : vector<128xf32>
    %15 = vector.multi_reduction <add>, %14, %cst_15 [0] : vector<32x128xf32> to vector<128xf32>
    %16 = vector.shape_cast %15 : vector<128xf32> to vector<1x128xf32>
    %17 = arith.mulf %14, %14 : vector<32x128xf32>
    %cst_16 = arith.constant dense<0.000000e+00> : vector<128xf32>
    %18 = vector.multi_reduction <add>, %17, %cst_16 [0] : vector<32x128xf32> to vector<128xf32>
    %19 = vector.shape_cast %18 : vector<128xf32> to vector<1x128xf32>
    %cst_17 = arith.constant 3.125000e-02 : f32
    %20 = vector.broadcast %cst_17 : f32 to vector<1x128xf32>
    %21 = arith.mulf %16, %20 : vector<1x128xf32>
    %cst_18 = arith.constant 3.125000e-02 : f32
    %22 = vector.broadcast %cst_18 : f32 to vector<1x128xf32>
    %23 = arith.mulf %19, %22 : vector<1x128xf32>
    %24 = arith.mulf %21, %21 : vector<1x128xf32>
    %25 = arith.subf %23, %24 : vector<1x128xf32>
    %26 = vector.broadcast %21 : vector<1x128xf32> to vector<32x128xf32>
    %27 = arith.subf %14, %26 : vector<32x128xf32>
    %cst_19 = arith.constant 9.99999974E-6 : f32
    %28 = vector.broadcast %cst_19 : f32 to vector<1x128xf32>
    %29 = arith.addf %25, %28 : vector<1x128xf32>
    %30 = math.rsqrt %29 : vector<1x128xf32>
    %31 = vector.broadcast %30 : vector<1x128xf32> to vector<32x128xf32>
    %32 = arith.mulf %27, %31 : vector<32x128xf32>
    %c0_20 = arith.constant 0 : index
    %c0_21 = arith.constant 0 : index
    %33 = vector.load %arg5[%c0_20, %c0_21] : memref<1x128xf32, #tpu.memory_space<vmem>>, vector<1x128xf32>
    %34 = vector.broadcast %33 : vector<1x128xf32> to vector<32x128xf32>
    %35 = arith.mulf %32, %34 : vector<32x128xf32>
    %c0_22 = arith.constant 0 : index
    %c0_23 = arith.constant 0 : index
    %36 = vector.load %arg6[%c0_22, %c0_23] : memref<1x128xf32, #tpu.memory_space<vmem>>, vector<1x128xf32>
    %37 = vector.broadcast %36 : vector<1x128xf32> to vector<32x128xf32>
    %38 = arith.addf %35, %37 : vector<32x128xf32>
    %cst_24 = arith.constant 0.000000e+00 : f32
    %39 = vector.broadcast %cst_24 : f32 to vector<32x128xf32>
    %40 = arith.maximumf %38, %39 : vector<32x128xf32>
    %c0_25 = arith.constant 0 : index
    %c0_26 = arith.constant 0 : index
    %41 = vector.load %arg7[%c0_25, %c0_26] : memref<128x128xf32, #tpu.memory_space<vmem>>, vector<128x128xf32>
    %cst_27 = arith.constant dense<0.000000e+00> : vector<32x128xf32>
    %42 = tpu.matmul %40, %41, %cst_27 {dimension_numbers = #tpu.dot_dimension_numbers<[1], [0], [0], [1], [0, 0, 1, 1], [], []>} : vector<32x128xf32>, vector<128x128xf32>, vector<32x128xf32> -> vector<32x128xf32>
    %c0_28 = arith.constant 0 : index
    %c0_29 = arith.constant 0 : index
    %43 = vector.load %arg8[%c0_28, %c0_29] : memref<1x128xf32, #tpu.memory_space<vmem>>, vector<1x128xf32>
    %44 = vector.broadcast %43 : vector<1x128xf32> to vector<32x128xf32>
    %45 = arith.addf %42, %44 : vector<32x128xf32>
    %46 = vector.shape_cast %45 : vector<32x128xf32> to vector<2x16x128xf32>
    %c0_30 = arith.constant 0 : index
    %c0_31 = arith.constant 0 : index
    %c0_32 = arith.constant 0 : index
    %47 = vector.load %arg9[%c0_30, %c0_31, %c0_32] : memref<2x16x128xf32, #tpu.memory_space<vmem>>, vector<2x16x128xf32>
    tpu.vector_store %arg9[%c0_30, %c0_31, %c0_32], %46 {strides = array<i32>} : memref<2x16x128xf32, #tpu.memory_space<vmem>>, vector<2x16x128xf32>,
    return
  }
}

</mosaic_0001>

<llo_original>
// kernel: tpu_custom_call.1
$region0: #{tpu_custom_call.1}
  #allocation0 [shape = 'u32[]', space=smem, size = 0x4, offset = 0x4, fixed_abs, tag = 'smem constant byte address 0x4 - core index']
  #allocation1 [shape = 'u32[144,128]{1,0:T(1,128)}', space=vmem, size = 0x12000, scoped, tag = 'internal scratch']
  #allocation2 [shape = 'f32[1]{0:T(128)S(6)}', space=smem, size = 0x200, scoped, tag = 'scoped memory for tpu_custom_call.1']
  %s0 = inlined_call_operand.<no memory space> [shape: f32[1], index: 0, kind: input, shape index: {}]
  %s1 = inlined_call_operand.hbm [shape: f32[2,16,128], index: 1, kind: input, shape index: {}]
  %s2 = inlined_call_operand.hbm [shape: f32[2,16,16], index: 2, kind: input, shape index: {}]
  %s3 = inlined_call_operand.hbm [shape: f32[128,128], index: 3, kind: input, shape index: {}]
  %s4 = inlined_call_operand.vmem [shape: f32[1,128], index: 4, kind: input, shape index: {}]
  %s5 = inlined_call_operand.vmem [shape: f32[1,128], index: 5, kind: input, shape index: {}]
  %s6 = inlined_call_operand.vmem [shape: f32[1,128], index: 6, kind: input, shape index: {}]
  %s7 = inlined_call_operand.hbm [shape: f32[128,128], index: 7, kind: input, shape index: {}]
  %s8 = inlined_call_operand.vmem [shape: f32[1,128], index: 8, kind: input, shape index: {}]
  %s9 = inlined_call_operand.hbm [shape: f32[2,16,128], index: 9, kind: output, shape index: {}]
  %s10 = sld [smem:[#allocation0]]
  $region62: #{tpu_custom_call.1} parent=0
    _
  %s12 = ssub.s32 1, %s10
  %s13 = scalar_select 0, %s12, %s10
  %14 = sst [smem:[#allocation2]] %s0
  $region1: #{tpu_custom_call.1} parent=0
    #allocation3 [shape = 'u8[16384]{0}', space=vmem, size = 0x4000, scoped, tag = 'input window, operand 1, single buffered']
    #allocation4 [shape = 's32[1]{0}', space=sflag, size = 0x4, scoped, tag = 'scoped memory for tpu_custom_call.1']
    #allocation5 [shape = 's32[1]{0}', space=sflag, size = 0x4, scoped, tag = 'scoped memory for tpu_custom_call.1']
    #allocation6 [shape = 'u8[16384]{0}', space=vmem, size = 0x4000, scoped, tag = 'input window, operand 2, single buffered']
    #allocation7 [shape = 's32[1]{0}', space=sflag, size = 0x4, scoped, tag = 'scoped memory for tpu_custom_call.1']
    #allocation8 [shape = 'u8[65536]{0}', space=vmem, size = 0x10000, scoped, tag = 'input window, operand 3, single buffered']
    #allocation9 [shape = 'u8[65536]{0}', space=vmem, size = 0x10000, scoped, tag = 'input window, operand 7, single buffered']
    #allocation10 [shape = 's32[1]{0}', space=sflag, size = 0x4, scoped, tag = 'scoped memory for tpu_custom_call.1']
    #allocation11 [shape = 'u8[16384]{0}', space=vmem, size = 0x4000, scoped, tag = 'output window, operand 0, single buffered']
    %15 = vsyncpa [#allocation4], 0
    %16 = vsyncpa [#allocation7], 0
    %17 = vsyncpa [#allocation10], 0
    %18 = vsyncpa [#allocation5], 0
    // Predicated region
    $region2: #{tpu_custom_call.1} parent=1 // pred_check
      _
    $region3: #{tpu_custom_call.1} parent=1 // pred_check_branch
      %20 = sbr.rel (0) target = $region5
    $region4: #{tpu_custom_call.1} parent=1 // pred_region
      _
    $region5: #{tpu_custom_call.1} parent=1 // pred_fallthru
      _
    // Predicated region
    $region6: #{tpu_custom_call.1} parent=1 // pred_check
      _
    $region7: #{tpu_custom_call.1} parent=1 // pred_check_branch
      %22 = sbr.rel (0) target = $region9
    $region8: #{tpu_custom_call.1} parent=1 // pred_region
      %s24 = ssub.s32 512, 512
      %25 = vsyncadd [#allocation4], %s24
      %s26 = sshll.u32 [#allocation3], 4
      %s27 = int_to_ptr.vmem [resolvable:$true] %s26
      %32 = dma.hbm_to_vmem [thread:$0]  %s1, 512, %s27, [#allocation4], 128, 128, 8
    $region9: #{tpu_custom_call.1} parent=1 // pred_fallthru
      _
    // Predicated region
    $region10: #{tpu_custom_call.1} parent=1 // pred_check
      _
    $region11: #{tpu_custom_call.1} parent=1 // pred_check_branch
      %34 = sbr.rel (0) target = $region13
    $region12: #{tpu_custom_call.1} parent=1 // pred_region
      %s36 = ssub.s32 512, 512
      %37 = vsyncadd [#allocation7], %s36
      %s38 = sshll.u32 [#allocation6], 4
      %s39 = int_to_ptr.vmem [resolvable:$true] %s38
      %44 = dma.hbm_to_vmem [thread:$0]  %s2, 512, %s39, [#allocation7], 128, 128, 8
    $region13: #{tpu_custom_call.1} parent=1 // pred_fallthru
      _
    // Predicated region
    $region14: #{tpu_custom_call.1} parent=1 // pred_check
      _
    $region15: #{tpu_custom_call.1} parent=1 // pred_check_branch
      %46 = sbr.rel (0) target = $region17
    $region16: #{tpu_custom_call.1} parent=1 // pred_region
      %s48 = ssub.s32 2048, 2048
      %49 = vsyncadd [#allocation7], %s48
      %s50 = sshll.u32 [#allocation8], 4
      %s51 = int_to_ptr.vmem [resolvable:$true] %s50
      %56 = dma.hbm_to_vmem [thread:$0]  %s3, 2048, %s51, [#allocation7], 128, 128, 8
    $region17: #{tpu_custom_call.1} parent=1 // pred_fallthru
      _
    // Predicated region
    $region18: #{tpu_custom_call.1} parent=1 // pred_check
      _
    $region19: #{tpu_custom_call.1} parent=1 // pred_check_branch
      %58 = sbr.rel (0) target = $region21
    $region20: #{tpu_custom_call.1} parent=1 // pred_region
      _
    $region21: #{tpu_custom_call.1} parent=1 // pred_fallthru
      _
    // Predicated region
    $region22: #{tpu_custom_call.1} parent=1 // pred_check
      _
    $region23: #{tpu_custom_call.1} parent=1 // pred_check_branch
      %60 = sbr.rel (0) target = $region25
    $region24: #{tpu_custom_call.1} parent=1 // pred_region
      _
    $region25: #{tpu_custom_call.1} parent=1 // pred_fallthru
      _
    // Predicated region
    $region26: #{tpu_custom_call.1} parent=1 // pred_check
      _
    $region27: #{tpu_custom_call.1} parent=1 // pred_check_branch
      %62 = sbr.rel (0) target = $region29
    $region28: #{tpu_custom_call.1} parent=1 // pred_region
      _
    $region29: #{tpu_custom_call.1} parent=1 // pred_fallthru
      _
    // Predicated region
    $region30: #{tpu_custom_call.1} parent=1 // pred_check
      _
    $region31: #{tpu_custom_call.1} parent=1 // pred_check_branch
      %64 = sbr.rel (0) target = $region33
    $region32: #{tpu_custom_call.1} parent=1 // pred_region
      %s66 = ssub.s32 2048, 2048
      %67 = vsyncadd [#allocation10], %s66
      %s68 = sshll.u32 [#allocation9], 4
      %s69 = int_to_ptr.vmem [resolvable:$true] %s68
      %74 = dma.hbm_to_vmem [thread:$0]  %s7, 2048, %s69, [#allocation10], 128, 128, 8
    $region33: #{tpu_custom_call.1} parent=1 // pred_fallthru
      _
    // Predicated region
    $region34: #{tpu_custom_call.1} parent=1 // pred_check
      _
    $region35: #{tpu_custom_call.1} parent=1 // pred_check_branch
      %76 = sbr.rel (0) target = $region37
    $region36: #{tpu_custom_call.1} parent=1 // pred_region
      _
    $region37: #{tpu_custom_call.1} parent=1 // pred_fallthru
      _
    // Predicated region
    $region38: #{tpu_custom_call.1} parent=1 // pred_check
      _
    $region39: #{tpu_custom_call.1} parent=1 // pred_check_branch
      %78 = sbr.rel (0) target = $region41
    $region40: #{tpu_custom_call.1} parent=1 // pred_region
      %79 = dma.done [#allocation4], 512
    $region41: #{tpu_custom_call.1} parent=1 // pred_fallthru
      _
    // Predicated region
    $region42: #{tpu_custom_call.1} parent=1 // pred_check
      _
    $region43: #{tpu_custom_call.1} parent=1 // pred_check_branch
      %81 = sbr.rel (0) target = $region45
    $region44: #{tpu_custom_call.1} parent=1 // pred_region
      %82 = dma.done [#allocation7], 512
    $region45: #{tpu_custom_call.1} parent=1 // pred_fallthru
      _
    // Predicated region
    $region46: #{tpu_custom_call.1} parent=1 // pred_check
      _
    $region47: #{tpu_custom_call.1} parent=1 // pred_check_branch
      %84 = sbr.rel (0) target = $region49
    $region48: #{tpu_custom_call.1} parent=1 // pred_region
      %85 = dma.done [#allocation7], 2048
    $region49: #{tpu_custom_call.1} parent=1 // pred_fallthru
      _
    // Predicated region
    $region50: #{tpu_custom_call.1} parent=1 // pred_check
      _
    $region51: #{tpu_custom_call.1} parent=1 // pred_check_branch
      %87 = sbr.rel (0) target = $region53
    $region52: #{tpu_custom_call.1} parent=1 // pred_region
      %88 = dma.done [#allocation10], 2048
    $region53: #{tpu_custom_call.1} parent=1 // pred_fallthru
      _
    %s89 = sld [smem:[#allocation2]]
    %v90 = vld [vmem:[#allocation6] sm:$0xff]
    %v91 = vld [vmem:[#allocation6 + $0x8] sm:$0xff]
    %v92 = vld [vmem:[#allocation6 + $0x10] sm:$0xff]
    %v93 = vld [vmem:[#allocation6 + $0x18] sm:$0xff]
    %v94 = vld [vmem:[#allocation3] sm:$0xff]
    %v95 = vld [vmem:[#allocation3 + $0x8] sm:$0xff]
    %v96 = vld [vmem:[#allocation3 + $0x10] sm:$0xff]
    %v97 = vld [vmem:[#allocation3 + $0x18] sm:$0xff]
    %vm98 = vcmask 130048
    %v100 = vsel %vm98, %v90, 0
    %v103 = vsel %vm98, %v91, 0
    %105 = vmatprep.subr.mxu0 0.0
    %106 = vmatpush1.msra.mxu0 0.0
    %107 = vmatprep.subr.mxu0 0.0
    %108 = vmatpush1.msra.mxu0 0.0
    %109 = vmatprep.subr.mxu0 0.0
    %110 = vmatpush1.msra.mxu0 0.0
    %111 = vmatprep.subr.mxu0 0.0
    %112 = vmatpush1.msra.mxu0 0.0
    %113 = vmatprep.subr.mxu0 0.0
    %114 = vmatpush1.msra.mxu0 0.0
    %115 = vmatprep.subr.mxu0 0.0
    %116 = vmatpush1.msra.mxu0 0.0
    %117 = vmatprep.subr.mxu0 0.0
    %118 = vmatpush1.msra.mxu0 0.0
    %119 = vmatprep.subr.mxu0 0.0
    %120 = vmatpush1.msra.mxu0 0.0
    %121 = vmatprep.subr.mxu0 0.0
    %122 = vmatpush1.msra.mxu0 0.0
    %123 = vmatprep.subr.mxu0 0.0
    %124 = vmatpush1.msra.mxu0 0.0
    %125 = vmatprep.subr.mxu0 0.0
    %126 = vmatpush1.msra.mxu0 0.0
    %127 = vmatprep.subr.mxu0 0.0
    %128 = vmatpush1.msra.mxu0 0.0
    %129 = vmatprep.subr.mxu0 0.0
    %130 = vmatpush1.msra.mxu0 0.0
    %131 = vmatprep.subr.mxu0 0.0
    %132 = vmatpush1.msra.mxu0 0.0
    %133 = vmatprep.subr.mxu0 0.0
    %134 = vmatpush1.msra.mxu0 %v95
    %135 = vmatprep.subr.mxu0 0.0
    %136 = vmatpush1.msra.mxu0 %v94
    %137 = vmatprep.subr.mxu0 0.0
    %138 = vmatpush2.msra.mxu0 0.0
    %139 = vmatprep.subr.mxu0 0.0
    %140 = vmatpush2.msra.mxu0 0.0
    %141 = vmatprep.subr.mxu0 0.0
    %142 = vmatpush2.msra.mxu0 0.0
    %143 = vmatprep.subr.mxu0 0.0
    %144 = vmatpush2.msra.mxu0 0.0
    %145 = vmatprep.subr.mxu0 0.0
    %146 = vmatpush2.msra.mxu0 0.0
    %147 = vmatprep.subr.mxu0 0.0
    %148 = vmatpush2.msra.mxu0 0.0
    %149 = vmatprep.subr.mxu0 0.0
    %150 = vmatpush2.msra.mxu0 0.0
    %151 = vmatprep.subr.mxu0 0.0
    %152 = vmatpush2.msra.mxu0 0.0
    %153 = vmatprep.subr.mxu0 0.0
    %154 = vmatpush2.msra.mxu0 0.0
    %155 = vmatprep.subr.mxu0 0.0
    %156 = vmatpush2.msra.mxu0 0.0
    %157 = vmatprep.subr.mxu0 0.0
    %158 = vmatpush2.msra.mxu0 0.0
    %159 = vmatprep.subr.mxu0 0.0
    %160 = vmatpush2.msra.mxu0 0.0
    %161 = vmatprep.subr.mxu0 0.0
    %162 = vmatpush2.msra.mxu0 0.0
    %163 = vmatprep.subr.mxu0 0.0
    %164 = vmatpush2.msra.mxu0 0.0
    %165 = vmatprep.subr.mxu0 0.0
    %166 = vmatpush2.msra.mxu0 0.0
    %167 = vmatprep.subr.mxu0 0.0
    %168 = vmatpush2.msra.mxu0 0.0
    %169 = vmatprep.mubr.f32.mxu0 0.0
    %170 = vmatmul.mubr.f32.gmra.mxu0 %v100
    %v171 = vpop.f32.mrf.mxu0
    %v172 = vadd.f32 0.0, %v171
    %v173 = vpop.f32.mrf.mxu0
    %174 = vmatprep.mubr.f32.mxu0 0.0
    %175 = vmatmul.mubr.f32.gmra.mxu0 %v103
    %v176 = vpop.f32.mrf.mxu0
    %v177 = vadd.f32 0.0, %v176
    %v178 = vpop.f32.mrf.mxu0
    %179 = vdwg.mxu0
    %v181 = vsel %vm98, %v92, 0
    %v184 = vsel %vm98, %v93, 0
    %186 = vmatprep.subr.mxu0 0.0
    %187 = vmatpush1.msra.mxu0 0.0
    %188 = vmatprep.subr.mxu0 0.0
    %189 = vmatpush1.msra.mxu0 0.0
    %190 = vmatprep.subr.mxu0 0.0
    %191 = vmatpush1.msra.mxu0 0.0
    %192 = vmatprep.subr.mxu0 0.0
    %193 = vmatpush1.msra.mxu0 0.0
    %194 = vmatprep.subr.mxu0 0.0
    %195 = vmatpush1.msra.mxu0 0.0
    %196 = vmatprep.subr.mxu0 0.0
    %197 = vmatpush1.msra.mxu0 0.0
    %198 = vmatprep.subr.mxu0 0.0
    %199 = vmatpush1.msra.mxu0 0.0
    %200 = vmatprep.subr.mxu0 0.0
    %201 = vmatpush1.msra.mxu0 0.0
    %202 = vmatprep.subr.mxu0 0.0
    %203 = vmatpush1.msra.mxu0 0.0
    %204 = vmatprep.subr.mxu0 0.0
    %205 = vmatpush1.msra.mxu0 0.0
    %206 = vmatprep.subr.mxu0 0.0
    %207 = vmatpush1.msra.mxu0 0.0
    %208 = vmatprep.subr.mxu0 0.0
    %209 = vmatpush1.msra.mxu0 0.0
    %210 = vmatprep.subr.mxu0 0.0
    %211 = vmatpush1.msra.mxu0 0.0
    %212 = vmatprep.subr.mxu0 0.0
    %213 = vmatpush1.msra.mxu0 0.0
    %214 = vmatprep.subr.mxu0 0.0
    %215 = vmatpush1.msra.mxu0 %v97
    %216 = vmatprep.subr.mxu0 0.0
    %217 = vmatpush1.msra.mxu0 %v96
    %218 = vmatprep.subr.mxu0 0.0
    %219 = vmatpush2.msra.mxu0 0.0
    %220 = vmatprep.subr.mxu0 0.0
    %221 = vmatpush2.msra.mxu0 0.0
    %222 = vmatprep.subr.mxu0 0.0
    %223 = vmatpush2.msra.mxu0 0.0
    %224 = vmatprep.subr.mxu0 0.0
    %225 = vmatpush2.msra.mxu0 0.0
    %226 = vmatprep.subr.mxu0 0.0
    %227 = vmatpush2.msra.mxu0 0.0
    %228 = vmatprep.subr.mxu0 0.0
    %229 = vmatpush2.msra.mxu0 0.0
    %230 = vmatprep.subr.mxu0 0.0
    %231 = vmatpush2.msra.mxu0 0.0
    %232 = vmatprep.subr.mxu0 0.0
    %233 = vmatpush2.msra.mxu0 0.0
    %234 = vmatprep.subr.mxu0 0.0
    %235 = vmatpush2.msra.mxu0 0.0
    %236 = vmatprep.subr.mxu0 0.0
    %237 = vmatpush2.msra.mxu0 0.0
    %238 = vmatprep.subr.mxu0 0.0
    %239 = vmatpush2.msra.mxu0 0.0
    %240 = vmatprep.subr.mxu0 0.0
    %241 = vmatpush2.msra.mxu0 0.0
    %242 = vmatprep.subr.mxu0 0.0
    %243 = vmatpush2.msra.mxu0 0.0
    %244 = vmatprep.subr.mxu0 0.0
    %245 = vmatpush2.msra.mxu0 0.0
    %246 = vmatprep.subr.mxu0 0.0
    %247 = vmatpush2.msra.mxu0 0.0
    %248 = vmatprep.subr.mxu0 0.0
    %249 = vmatpush2.msra.mxu0 0.0
    %250 = vmatprep.mubr.f32.mxu0 0.0
    %251 = vmatmul.mubr.f32.gmra.mxu0 %v181
    %v252 = vpop.f32.mrf.mxu0
    %v253 = vadd.f32 0.0, %v252
    %v254 = vpop.f32.mrf.mxu0
    %255 = vmatprep.mubr.f32.mxu0 0.0
    %256 = vmatmul.mubr.f32.gmra.mxu0 %v184
    %v257 = vpop.f32.mrf.mxu0
    %v258 = vadd.f32 0.0, %v257
    %v259 = vpop.f32.mrf.mxu0
    %260 = vdwg.mxu0
    %s261 = sadd.f32 %s89, 1.0
    %v262 = vstv %s261
    %v263 = vmul.f32 %v262, %v94
    %v264 = vmul.f32 %v262, %v95
    %v265 = vmul.f32 %v262, %v96
    %v266 = vmul.f32 %v262, %v97
    %v267 = vadd.f32 %v263, %v172
    %v268 = vadd.f32 %v264, %v177
    %v269 = vadd.f32 %v265, %v253
    %v270 = vadd.f32 %v266, %v258
    %v271 = vld [vmem:[#allocation8] sm:$0xff]
    %v272 = vld [vmem:[#allocation8 + $0x8] sm:$0xff]
    %v273 = vld [vmem:[#allocation8 + $0x10] sm:$0xff]
    %v274 = vld [vmem:[#allocation8 + $0x18] sm:$0xff]
    %v275 = vld [vmem:[#allocation8 + $0x20] sm:$0xff]
    %v276 = vld [vmem:[#allocation8 + $0x28] sm:$0xff]
    %v277 = vld [vmem:[#allocation8 + $0x30] sm:$0xff]
    %v278 = vld [vmem:[#allocation8 + $0x38] sm:$0xff]
    %v279 = vld [vmem:[#allocation8 + $0x40] sm:$0xff]
    %v280 = vld [vmem:[#allocation8 + $0x48] sm:$0xff]
    %v281 = vld [vmem:[#allocation8 + $0x50] sm:$0xff]
    %v282 = vld [vmem:[#allocation8 + $0x58] sm:$0xff]
    %v283 = vld [vmem:[#allocation8 + $0x60] sm:$0xff]
    %v284 = vld [vmem:[#allocation8 + $0x68] sm:$0xff]
    %v285 = vld [vmem:[#allocation8 + $0x70] sm:$0xff]
    %v286 = vld [vmem:[#allocation8 + $0x78] sm:$0xff]
    %v287 = vld [vmem:[%s4] sm:$0x1]
    %v289 = vlaneseq
    %v290 = vshrl.u32 %v289, 7
    %v291 = vsub.s32 0, %v290
    %v292 = vrot.slane %v287, %v291
    %294 = vmatprep.subr.mxu0 0.0
    %295 = vmatpush1.msra.mxu0 %v286
    %296 = vmatprep.subr.mxu0 0.0
    %297 = vmatpush1.msra.mxu0 %v285
    %298 = vmatprep.subr.mxu0 0.0
    %299 = vmatpush1.msra.mxu0 %v284
    %300 = vmatprep.subr.mxu0 0.0
    %301 = vmatpush1.msra.mxu0 %v283
    %302 = vmatprep.subr.mxu0 0.0
    %303 = vmatpush1.msra.mxu0 %v282
    %304 = vmatprep.subr.mxu0 0.0
    %305 = vmatpush1.msra.mxu0 %v281
    %306 = vmatprep.subr.mxu0 0.0
    %307 = vmatpush1.msra.mxu0 %v280
    %308 = vmatprep.subr.mxu0 0.0
    %309 = vmatpush1.msra.mxu0 %v279
    %310 = vmatprep.subr.mxu0 0.0
    %311 = vmatpush1.msra.mxu0 %v278
    %312 = vmatprep.subr.mxu0 0.0
    %313 = vmatpush1.msra.mxu0 %v277
    %314 = vmatprep.subr.mxu0 0.0
    %315 = vmatpush1.msra.mxu0 %v276
    %316 = vmatprep.subr.mxu0 0.0
    %317 = vmatpush1.msra.mxu0 %v275
    %318 = vmatprep.subr.mxu0 0.0
    %319 = vmatpush1.msra.mxu0 %v274
    %320 = vmatprep.subr.mxu0 0.0
    %321 = vmatpush1.msra.mxu0 %v273
    %322 = vmatprep.subr.mxu0 0.0
    %323 = vmatpush1.msra.mxu0 %v272
    %324 = vmatprep.subr.mxu0 0.0
    %325 = vmatpush1.msra.mxu0 %v271
    %326 = vmatprep.subr.mxu0 0.0
    %327 = vmatpush2.msra.mxu0 0.0
    %328 = vmatprep.subr.mxu0 0.0
    %329 = vmatpush2.msra.mxu0 0.0
    %330 = vmatprep.subr.mxu0 0.0
    %331 = vmatpush2.msra.mxu0 0.0
    %332 = vmatprep.subr.mxu0 0.0
    %333 = vmatpush2.msra.mxu0 0.0
    %334 = vmatprep.subr.mxu0 0.0
    %335 = vmatpush2.msra.mxu0 0.0
    %336 = vmatprep.subr.mxu0 0.0
    %337 = vmatpush2.msra.mxu0 0.0
    %338 = vmatprep.subr.mxu0 0.0
    %339 = vmatpush2.msra.mxu0 0.0
    %340 = vmatprep.subr.mxu0 0.0
    %341 = vmatpush2.msra.mxu0 0.0
    %342 = vmatprep.subr.mxu0 0.0
    %343 = vmatpush2.msra.mxu0 0.0
    %344 = vmatprep.subr.mxu0 0.0
    %345 = vmatpush2.msra.mxu0 0.0
    %346 = vmatprep.subr.mxu0 0.0
    %347 = vmatpush2.msra.mxu0 0.0
    %348 = vmatprep.subr.mxu0 0.0
    %349 = vmatpush2.msra.mxu0 0.0
    %350 = vmatprep.subr.mxu0 0.0
    %351 = vmatpush2.msra.mxu0 0.0
    %352 = vmatprep.subr.mxu0 0.0
    %353 = vmatpush2.msra.mxu0 0.0
    %354 = vmatprep.subr.mxu0 0.0
    %355 = vmatpush2.msra.mxu0 0.0
    %356 = vmatprep.subr.mxu0 0.0
    %357 = vmatpush2.msra.mxu0 0.0
    %358 = vmatprep.mubr.f32.mxu0 0.0
    %359 = vmatmul.mubr.f32.gmra.mxu0 %v267
    %v360 = vpop.f32.mrf.mxu0
    %v361 = vadd.f32 %v292, %v360
    %v362 = vpop.f32.mrf.mxu0
    %363 = vmatprep.mubr.f32.mxu0 0.0
    %364 = vmatmul.mubr.f32.gmra.mxu0 %v268
    %v365 = vpop.f32.mrf.mxu0
    %v366 = vadd.f32 %v292, %v365
    %v367 = vpop.f32.mrf.mxu0
    %368 = vmatprep.mubr.f32.mxu0 0.0
    %369 = vmatmul.mubr.f32.gmra.mxu0 %v269
    %v370 = vpop.f32.mrf.mxu0
    %v371 = vadd.f32 %v292, %v370
    %v372 = vpop.f32.mrf.mxu0
    %373 = vmatprep.mubr.f32.mxu0 0.0
    %374 = vmatmul.mubr.f32.gmra.mxu0 %v270
    %v375 = vpop.f32.mrf.mxu0
    %v376 = vadd.f32 %v292, %v375
    %v377 = vpop.f32.mrf.mxu0
    %378 = vdwg.mxu0
    %v379 = vadd.f32 %v361, %v366
    %v380 = vadd.f32 %v379, %v371
    %v381 = vadd.f32 %v380, %v376
    %v382 = vrot.slane %v381, 4
    %v383 = vadd.f32 %v381, %v382
    %v384 = vrot.slane %v383, 2
    %v385 = vadd.f32 %v383, %v384
    %v386 = vrot.slane %v385, 1
    %v387 = vadd.f32 %v385, %v386
    %v388 = vmul.f32 %v361, %v361
    %v389 = vmul.f32 %v366, %v366
    %v390 = vmul.f32 %v371, %v371
    %v391 = vmul.f32 %v376, %v376
    %v392 = vadd.f32 %v388, %v389
    %v393 = vadd.f32 %v392, %v390
    %v394 = vadd.f32 %v393, %v391
    %v395 = vrot.slane %v394, 4
    %v396 = vadd.f32 %v394, %v395
    %v397 = vrot.slane %v396, 2
    %v398 = vadd.f32 %v396, %v397
    %v399 = vrot.slane %v398, 1
    %v400 = vadd.f32 %v398, %v399
    %v401 = vmul.f32 %v387, 0.03125
    %v402 = vmul.f32 %v400, 0.03125
    %v403 = vmul.f32 %v401, %v401
    %v404 = vsub.f32 %v402, %v403
    %v405 = vsub.f32 %v361, %v401
    %v406 = vsub.f32 %v366, %v401
    %v407 = vsub.f32 %v371, %v401
    %v408 = vsub.f32 %v376, %v401
    %v409 = vadd.f32 %v404, 1e-05
    %v410 = vrsqrt.pop %v409
    %v411 = vmul.f32 %v405, %v410
    %v412 = vmul.f32 %v406, %v410
    %v413 = vmul.f32 %v407, %v410
    %v414 = vmul.f32 %v408, %v410
    %v415 = vld [vmem:[%s5] sm:$0x1]
    %v417 = vlaneseq
    %v418 = vshrl.u32 %v417, 7
    %v419 = vsub.s32 0, %v418
    %v420 = vrot.slane %v415, %v419
    %v422 = vmul.f32 %v411, %v420
    %v423 = vmul.f32 %v412, %v420
    %v424 = vmul.f32 %v413, %v420
    %v425 = vmul.f32 %v414, %v420
    %v426 = vld [vmem:[%s6] sm:$0x1]
    %v428 = vlaneseq
    %v429 = vshrl.u32 %v428, 7
    %v430 = vsub.s32 0, %v429
    %v431 = vrot.slane %v426, %v430
    %v433 = vadd.f32 %v422, %v431
    %v434 = vadd.f32 %v423, %v431
    %v435 = vadd.f32 %v424, %v431
    %v436 = vadd.f32 %v425, %v431
    %v437 = vmax.f32 %v433, 0.0
    %v438 = vmax.f32 %v434, 0.0
    %v439 = vmax.f32 %v435, 0.0
    %v440 = vmax.f32 %v436, 0.0
    %v441 = vld [vmem:[#allocation9] sm:$0xff]
    %v442 = vld [vmem:[#allocation9 + $0x8] sm:$0xff]
    %v443 = vld [vmem:[#allocation9 + $0x10] sm:$0xff]
    %v444 = vld [vmem:[#allocation9 + $0x18] sm:$0xff]
    %v445 = vld [vmem:[#allocation9 + $0x20] sm:$0xff]
    %v446 = vld [vmem:[#allocation9 + $0x28] sm:$0xff]
    %v447 = vld [vmem:[#allocation9 + $0x30] sm:$0xff]
    %v448 = vld [vmem:[#allocation9 + $0x38] sm:$0xff]
    %v449 = vld [vmem:[#allocation9 + $0x40] sm:$0xff]
    %v450 = vld [vmem:[#allocation9 + $0x48] sm:$0xff]
    %v451 = vld [vmem:[#allocation9 + $0x50] sm:$0xff]
    %v452 = vld [vmem:[#allocation9 + $0x58] sm:$0xff]
    %v453 = vld [vmem:[#allocation9 + $0x60] sm:$0xff]
    %v454 = vld [vmem:[#allocation9 + $0x68] sm:$0xff]
    %v455 = vld [vmem:[#allocation9 + $0x70] sm:$0xff]
    %v456 = vld [vmem:[#allocation9 + $0x78] sm:$0xff]
    %v457 = vld [vmem:[%s8] sm:$0x1]
    %v459 = vlaneseq
    %v460 = vshrl.u32 %v459, 7
    %v461 = vsub.s32 0, %v460
    %v462 = vrot.slane %v457, %v461
    %464 = vmatprep.subr.mxu0 0.0
    %465 = vmatpush1.msra.mxu0 %v456
    %466 = vmatprep.subr.mxu0 0.0
    %467 = vmatpush1.msra.mxu0 %v455
    %468 = vmatprep.subr.mxu0 0.0
    %469 = vmatpush1.msra.mxu0 %v454
    %470 = vmatprep.subr.mxu0 0.0
    %471 = vmatpush1.msra.mxu0 %v453
    %472 = vmatprep.subr.mxu0 0.0
    %473 = vmatpush1.msra.mxu0 %v452
    %474 = vmatprep.subr.mxu0 0.0
    %475 = vmatpush1.msra.mxu0 %v451
    %476 = vmatprep.subr.mxu0 0.0
    %477 = vmatpush1.msra.mxu0 %v450
    %478 = vmatprep.subr.mxu0 0.0
    %479 = vmatpush1.msra.mxu0 %v449
    %480 = vmatprep.subr.mxu0 0.0
    %481 = vmatpush1.msra.mxu0 %v448
    %482 = vmatprep.subr.mxu0 0.0
    %483 = vmatpush1.msra.mxu0 %v447
    %484 = vmatprep.subr.mxu0 0.0
    %485 = vmatpush1.msra.mxu0 %v446
    %486 = vmatprep.subr.mxu0 0.0
    %487 = vmatpush1.msra.mxu0 %v445
    %488 = vmatprep.subr.mxu0 0.0
    %489 = vmatpush1.msra.mxu0 %v444
    %490 = vmatprep.subr.mxu0 0.0
    %491 = vmatpush1.msra.mxu0 %v443
    %492 = vmatprep.subr.mxu0 0.0
    %493 = vmatpush1.msra.mxu0 %v442
    %494 = vmatprep.subr.mxu0 0.0
    %495 = vmatpush1.msra.mxu0 %v441
    %496 = vmatprep.subr.mxu0 0.0
    %497 = vmatpush2.msra.mxu0 0.0
    %498 = vmatprep.subr.mxu0 0.0
    %499 = vmatpush2.msra.mxu0 0.0
    %500 = vmatprep.subr.mxu0 0.0
    %501 = vmatpush2.msra.mxu0 0.0
    %502 = vmatprep.subr.mxu0 0.0
    %503 = vmatpush2.msra.mxu0 0.0
    %504 = vmatprep.subr.mxu0 0.0
    %505 = vmatpush2.msra.mxu0 0.0
    %506 = vmatprep.subr.mxu0 0.0
    %507 = vmatpush2.msra.mxu0 0.0
    %508 = vmatprep.subr.mxu0 0.0
    %509 = vmatpush2.msra.mxu0 0.0
    %510 = vmatprep.subr.mxu0 0.0
    %511 = vmatpush2.msra.mxu0 0.0
    %512 = vmatprep.subr.mxu0 0.0
    %513 = vmatpush2.msra.mxu0 0.0
    %514 = vmatprep.subr.mxu0 0.0
    %515 = vmatpush2.msra.mxu0 0.0
    %516 = vmatprep.subr.mxu0 0.0
    %517 = vmatpush2.msra.mxu0 0.0
    %518 = vmatprep.subr.mxu0 0.0
    %519 = vmatpush2.msra.mxu0 0.0
    %520 = vmatprep.subr.mxu0 0.0
    %521 = vmatpush2.msra.mxu0 0.0
    %522 = vmatprep.subr.mxu0 0.0
    %523 = vmatpush2.msra.mxu0 0.0
    %524 = vmatprep.subr.mxu0 0.0
    %525 = vmatpush2.msra.mxu0 0.0
    %526 = vmatprep.subr.mxu0 0.0
    %527 = vmatpush2.msra.mxu0 0.0
    %528 = vmatprep.mubr.f32.mxu0 0.0
    %529 = vmatmul.mubr.f32.gmra.mxu0 %v437
    %v530 = vpop.f32.mrf.mxu0
    %v531 = vadd.f32 %v462, %v530
    %v532 = vpop.f32.mrf.mxu0
    %533 = vmatprep.mubr.f32.mxu0 0.0
    %534 = vmatmul.mubr.f32.gmra.mxu0 %v438
    %v535 = vpop.f32.mrf.mxu0
    %v536 = vadd.f32 %v462, %v535
    %v537 = vpop.f32.mrf.mxu0
    %538 = vmatprep.mubr.f32.mxu0 0.0
    %539 = vmatmul.mubr.f32.gmra.mxu0 %v439
    %v540 = vpop.f32.mrf.mxu0
    %v541 = vadd.f32 %v462, %v540
    %v542 = vpop.f32.mrf.mxu0
    %543 = vmatprep.mubr.f32.mxu0 0.0
    %544 = vmatmul.mubr.f32.gmra.mxu0 %v440
    %v545 = vpop.f32.mrf.mxu0
    %v546 = vadd.f32 %v462, %v545
    %v547 = vpop.f32.mrf.mxu0
    %548 = vdwg.mxu0
    %549 = vst [vmem:[#allocation11] sm:$0xff] %v531
    %550 = vst [vmem:[#allocation11 + $0x8] sm:$0xff] %v536
    %551 = vst [vmem:[#allocation11 + $0x10] sm:$0xff] %v541
    %552 = vst [vmem:[#allocation11 + $0x18] sm:$0xff] %v546
    // Predicated region
    $region54: #{tpu_custom_call.1} parent=1 // pred_check
      _
    $region55: #{tpu_custom_call.1} parent=1 // pred_check_branch
      %554 = sbr.rel (0) target = $region57
    $region56: #{tpu_custom_call.1} parent=1 // pred_region
      %s556 = ssub.s32 512, 512
      %557 = vsyncadd [#allocation5], %s556
      %s558 = sshll.u32 [#allocation11], 4
      %s559 = int_to_ptr.vmem [resolvable:$true] %s558
      %564 = dma.vmem_to_hbm [thread:$0]  %s559, 512, %s9, [#allocation5], 128, 128, 8
    $region57: #{tpu_custom_call.1} parent=1 // pred_fallthru
      _
    // Predicated region
    $region58: #{tpu_custom_call.1} parent=1 // pred_check
      _
    $region59: #{tpu_custom_call.1} parent=1 // pred_check_branch
      %566 = sbr.rel (0) target = $region61
    $region60: #{tpu_custom_call.1} parent=1 // pred_region
      %567 = dma.done [#allocation5], 512
    $region61: #{tpu_custom_call.1} parent=1 // pred_fallthru
      _
    %568 = vsyncpa [#allocation4], 1
    %569 = vsyncpa [#allocation7], 1
    %570 = vsyncpa [#allocation10], 1
    %571 = vsyncpa [#allocation5], 1

</llo_original>
